<compile_context>
chip_gen: v6e
topology: v6e:2x2x1
jax: 0.10.0
libtpu: 0.0.40
codegen_flags: <defaults>
</compile_context>

<pallas_src>
import math
from functools import partial

import jax
import jax.numpy as jnp
from jax import lax
from jax.experimental import pallas as pl
from jax.experimental.pallas import tpu as pltpu

_LANES = 128  # lane-dense padded width; real hidden size is 32


def _attention_kernel(x_ref, w_ref, o_ref, *, seq):
    """Fused QKV projection (+bias, +1/sqrt(h) scale) -> scores -> softmax -> probs*v."""
    tb = x_ref.shape[0]  # batch tile per grid step

    # One bf16 MXU matmul (K=128, M=tb*seq) computes all three projections + biases:
    #   qkv[..,   0:128] = query @ (wq/sqrt(h)) + bq/sqrt(h)   (cols >= hidden are 0)
    #   qkv[.., 128:256] = key   @ wk + bk
    #   qkv[.., 256:384] = value @ wv + bv
    x2d = x_ref[...].reshape(tb * seq, _LANES)  # stack batch tile into MXU M rows
    qkv = jnp.dot(x2d, w_ref[...], preferred_element_type=jnp.float32)
    qkv = qkv.reshape(tb, seq, 3 * _LANES)
    q = qkv[..., 0 * _LANES:1 * _LANES]
    k = qkv[..., 1 * _LANES:2 * _LANES]
    v = qkv[..., 2 * _LANES:3 * _LANES]

    # Zero-pad key rows to 128 sublanes (8-aligned -> cheap, no relayout) so the
    # score matmul emits a lane-dense (seq, 128) tile per sequence.
    k_pad = jnp.concatenate(
        [k, jnp.zeros((tb, _LANES - seq, _LANES), k.dtype)], axis=1)
    scores = jnp.einsum('bqd,bkd->bqk', q, k_pad,
                        preferred_element_type=jnp.float32)       # (tb, seq, 128)

    # Mask padded key lanes, then a numerically stable softmax at full 128-lane width.
    lane = lax.broadcasted_iota(jnp.int32, scores.shape, 2)
    scores = jnp.where(lane < seq, scores, -1e30)
    m = jnp.max(scores, axis=-1, keepdims=True)
    e = jnp.exp(scores - m)
    probs = e / jnp.sum(e, axis=-1, keepdims=True)   # exact normalization

    # TODO(synk): nn.Dropout(0.1) is identity in eval mode; training-mode dropout omitted.

    # Reference semantics: output = probs * value (elementwise; requires seq == hidden).
    # probs' masked lanes and v's padded lanes are both zero, so the padded output
    # columns are exactly zero and the (tb, seq, 128) store is unmasked / lane-dense.
    o_ref[...] = (probs * v).astype(o_ref.dtype)


def pack_weights(params, hidden):
    """Build the (128, 3*128) bf16 weight slab: one 128-row contraction group.

    Row layout (contraction axis): [ wq | bias row | wk | wv | 0-pad ]
    Col layout (output axis):      [ q segment 0:128 | k 128:256 | v 256:384 ]
    1/sqrt(hidden) is folded into wq / bq.  Built once offline, so the .at[].set()
    scatters here are not on the hot path; exact zeros survive the bf16 cast."""
    hp = _LANES
    assert 3 * hidden + 1 <= hp
    scale = 1.0 / math.sqrt(hidden)
    w = jnp.zeros((hp, 3 * hp), jnp.float32)
    w = w.at[0:hidden, 0:hidden].set(params["wq"] * scale)
    w = w.at[hidden, 0:hidden].set(params["bq"].reshape(-1) * scale)
    w = w.at[hidden, hp:hp + hidden].set(params["bk"].reshape(-1))
    w = w.at[hidden, 2 * hp:2 * hp + hidden].set(params["bv"].reshape(-1))
    w = w.at[hidden + 1:2 * hidden + 1, hp:hp + hidden].set(params["wk"])
    w = w.at[2 * hidden + 1:3 * hidden + 1, 2 * hp:2 * hp + hidden].set(params["wv"])
    return w.astype(jnp.bfloat16)


def pack_activations(query, key, value):
    """Pack [query | 1 | key | value | 0-pad] into a (B, S, 128) bf16 slab with a
    single concatenate (no chained .at[].set() scatters in the XLA prologue)."""
    b, s, h = query.shape
    ones = jnp.ones((b, s, 1), jnp.float32)
    pad = jnp.zeros((b, s, _LANES - (3 * h + 1)), jnp.float32)
    x = jnp.concatenate([query, ones, key, value, pad], axis=-1)
    return x.astype(jnp.bfloat16)


def attention_mechanism(query, key, value, w_packed, *, batch_tile=2):
    """query/key/value: (B, S, H) with S == H (reference `scores * value` broadcast)."""
    b, s, h = query.shape
    assert s == h, "reference `scores * value` broadcast requires seq == hidden"
    assert s % 8 == 0 and 3 * h + 1 <= _LANES
    tb = batch_tile if b % batch_tile == 0 else 1

    x_packed = pack_activations(query, key, value)          # (B, S, 128) bf16

    out_padded = pl.pallas_call(
        partial(_attention_kernel, seq=s),
        out_shape=jax.ShapeDtypeStruct((b, s, _LANES), jnp.float32),
        grid=(b // tb,),
        in_specs=[
            # activations: one (tb, S, 128) tile per grid step, auto double-buffered
            pl.BlockSpec((tb, s, _LANES), lambda i: (i, 0, 0)),
            # weights: constant index_map -> fetched once, stays VMEM-resident
            pl.BlockSpec((_LANES, 3 * _LANES), lambda i: (0, 0)),
        ],
        out_specs=pl.BlockSpec((tb, s, _LANES), lambda i: (i, 0, 0)),
        compiler_params=pltpu.CompilerParams(
            dimension_semantics=("parallel",)),   # batch axis -> 2nd TC on v7x
    )(x_packed, w_packed)
    return out_padded[:, :, :h]


def _init_params(key, hidden):
    # Deterministic synthetic init mimicking nn.Linear(hidden, hidden):
    # torch weight is (out, in); we store its transpose (in, out) for x @ W.
    ks = jax.random.split(key, 6)
    bound = 1.0 / math.sqrt(hidden)

    def w(k):
        return jax.random.uniform(k, (hidden, hidden), jnp.float32, -bound, bound)

    def b(k):
        return jax.random.uniform(k, (1, hidden), jnp.float32, -bound, bound)

    return {
        "wq": w(ks[0]), "bq": b(ks[1]),
        "wk": w(ks[2]), "bk": b(ks[3]),
        "wv": w(ks[4]), "bv": b(ks[5]),
    }


def _reference(query, key, value, params, hidden):
    q = query @ params["wq"] + params["bq"]
    k = key @ params["wk"] + params["bk"]
    v = value @ params["wv"] + params["bv"]
    scores = jnp.einsum('bqh,bkh->bqk', q, k) / math.sqrt(hidden)
    probs = jax.nn.softmax(scores, axis=-1)
    return probs * v


if __name__ == "__main__":
    BATCH = 4      # repeated module invocations, mapped to the Pallas batch grid
    SEQ = 32
    HIDDEN = 32    # seq == hidden so the reference broadcast `scores * value` is valid

    root = jax.random.PRNGKey(0)
    kq, kk, kv, kp = jax.random.split(root, 4)
    query = jax.random.normal(kq, (BATCH, SEQ, HIDDEN), jnp.float32)
    key = jax.random.normal(kk, (BATCH, SEQ, HIDDEN), jnp.float32)
    value = jax.random.normal(kv, (BATCH, SEQ, HIDDEN), jnp.float32)
    params = _init_params(kp, HIDDEN)

    w_packed = pack_weights(params, HIDDEN)   # one-time, offline weight pack (bf16)

    out = attention_mechanism(query, key, value, w_packed)
    out = jax.block_until_ready(out)

    ref = _reference(query, key, value, params, HIDDEN)
    assert out.shape == (BATCH, SEQ, HIDDEN)
    # bf16 MXU operands (with f32 accumulation) drift ~1e-3 relative vs the pure-f32
    # reference; 2e-2 leaves margin while still catching any structural error.
    assert jnp.allclose(out, ref, atol=2e-2, rtol=2e-2), "mismatch vs pure-JAX reference"

    print("KERNEL_OK")
</pallas_src>

<mosaic_0001>
module attributes {stable_mosaic.version = 11 : i64} {
  func.func @_attention_kernel(%arg0: i32, %arg1: memref<2x32x128xbf16, #tpu.memory_space<vmem>>, %arg2: memref<128x384xbf16, #tpu.memory_space<vmem>>, %arg3: memref<2x32x128xf32, #tpu.memory_space<vmem>>) attributes {dimension_semantics = [#tpu.dimension_semantics<parallel>], iteration_bounds = array<i64: 2>, scalar_prefetch = 0 : i64, scratch_operands = 0 : i64, tpu.core_type = #tpu.core_type<tc>, window_params = [{transform_indices = @transform_0, window_bounds = array<i64: 2, 32, 128>}, {pipeline_mode = #tpu.pipeline_mode<synchronous>, transform_indices = @transform_1, window_bounds = array<i64: 128, 384>}, {transform_indices = @transform_2, window_bounds = array<i64: 2, 32, 128>}]} {
    %c0 = arith.constant 0 : index
    %c0_0 = arith.constant 0 : index
    %c0_1 = arith.constant 0 : index
    %0 = vector.load %arg1[%c0, %c0_0, %c0_1] : memref<2x32x128xbf16, #tpu.memory_space<vmem>>, vector<2x32x128xbf16>
    %1 = vector.shape_cast %0 : vector<2x32x128xbf16> to vector<64x128xbf16>
    %c0_2 = arith.constant 0 : index
    %c0_3 = arith.constant 0 : index
    %2 = vector.load %arg2[%c0_2, %c0_3] : memref<128x384xbf16, #tpu.memory_space<vmem>>, vector<128x384xbf16>
    %cst = arith.constant dense<0.000000e+00> : vector<64x384xf32>
    %3 = tpu.matmul %1, %2, %cst {dimension_numbers = #tpu.dot_dimension_numbers<[1], [0], [0], [1], [0, 0, 1, 1], [], []>} : vector<64x128xbf16>, vector<128x384xbf16>, vector<64x384xf32> -> vector<64x384xf32>
    %4 = vector.shape_cast %3 : vector<64x384xf32> to vector<2x32x384xf32>
    %5 = vector.extract_strided_slice %4 {offsets = [0, 0, 0], sizes = [2, 32, 128], strides = [1, 1, 1]} : vector<2x32x384xf32> to vector<2x32x128xf32>
    %6 = vector.extract_strided_slice %4 {offsets = [0, 0, 128], sizes = [2, 32, 128], strides = [1, 1, 1]} : vector<2x32x384xf32> to vector<2x32x128xf32>
    %7 = vector.extract_strided_slice %4 {offsets = [0, 0, 256], sizes = [2, 32, 128], strides = [1, 1, 1]} : vector<2x32x384xf32> to vector<2x32x128xf32>
    %cst_4 = arith.constant 0.000000e+00 : f32
    %8 = vector.broadcast %cst_4 : f32 to vector<2x96x128xf32>
    %9 = tpu.concatenate %6, %8 in 1 : vector<2x32x128xf32>, vector<2x96x128xf32> -> vector<2x128x128xf32>
    "tpu.trace_start"() <{level = 10 : i32, message = "bqd,bkd->bqk"}> : () -> ()
    %cst_5 = arith.constant dense<0.000000e+00> : vector<2x32x128xf32>
    %10 = tpu.matmul %5, %9, %cst_5 {dimension_numbers = #tpu.dot_dimension_numbers<[2], [2], [1], [1], [0, 0, 0, 1, 1, 1], [0], [0]>} : vector<2x32x128xf32>, vector<2x128x128xf32>, vector<2x32x128xf32> -> vector<2x32x128xf32>
    "tpu.trace_stop"() : () -> ()
    %11 = tpu.iota {dimensions = array<i32: 2>} : vector<2x32x128xi32>
    %c32_i32 = arith.constant 32 : i32
    %12 = vector.broadcast %c32_i32 : i32 to vector<2x32x128xi32>
    %13 = arith.cmpi slt, %11, %12 : vector<2x32x128xi32>
    %cst_6 = arith.constant -1.000000e+30 : f32
    %14 = vector.broadcast %cst_6 : f32 to vector<2x32x128xf32>
    %15 = arith.select %13, %10, %14 : vector<2x32x128xi1>, vector<2x32x128xf32>
    %cst_7 = arith.constant dense<0xFF800000> : vector<2x32xf32>
    %16 = vector.multi_reduction <maximumf>, %15, %cst_7 [2] : vector<2x32x128xf32> to vector<2x32xf32>
    %17 = vector.shape_cast %16 : vector<2x32xf32> to vector<2x32x1xf32>
    %18 = vector.broadcast %17 : vector<2x32x1xf32> to vector<2x32x128xf32>
    %19 = arith.subf %15, %18 : vector<2x32x128xf32>
    %20 = math.exp %19 : vector<2x32x128xf32>
    %cst_8 = arith.constant dense<0.000000e+00> : vector<2x32xf32>
    %21 = vector.multi_reduction <add>, %20, %cst_8 [2] : vector<2x32x128xf32> to vector<2x32xf32>
    %22 = vector.shape_cast %21 : vector<2x32xf32> to vector<2x32x1xf32>
    %23 = vector.broadcast %22 : vector<2x32x1xf32> to vector<2x32x128xf32>
    %24 = arith.divf %20, %23 : vector<2x32x128xf32>
    %25 = arith.mulf %24, %7 : vector<2x32x128xf32>
    %c0_9 = arith.constant 0 : index
    %c0_10 = arith.constant 0 : index
    %c0_11 = arith.constant 0 : index
    %26 = vector.load %arg3[%c0_9, %c0_10, %c0_11] : memref<2x32x128xf32, #tpu.memory_space<vmem>>, vector<2x32x128xf32>
    tpu.vector_store %arg3[%c0_9, %c0_10, %c0_11], %25 {strides = array<i32>} : memref<2x32x128xf32, #tpu.memory_space<vmem>>, vector<2x32x128xf32>,
    return
  }
  func.func @transform_0(%arg0: i32) -> (i32, i32, i32) {
    %c0_i32 = arith.constant 0 : i32
    %c0_i32_0 = arith.constant 0 : i32
    %c0_i32_1 = arith.constant 0 : i32
    return %arg0, %c0_i32, %c0_i32_0 : i32, i32, i32
  }
  func.func @transform_1(%arg0: i32) -> (i32, i32) {
    %c0_i32 = arith.constant 0 : i32
    %c0_i32_0 = arith.constant 0 : i32
    %c0_i32_1 = arith.constant 0 : i32
    return %c0_i32, %c0_i32_0 : i32, i32
  }
  func.func @transform_2(%arg0: i32) -> (i32, i32, i32) {
    %c0_i32 = arith.constant 0 : i32
    %c0_i32_0 = arith.constant 0 : i32
    %c0_i32_1 = arith.constant 0 : i32
    return %arg0, %c0_i32, %c0_i32_0 : i32, i32, i32
  }
}

</mosaic_0001>

<llo_original>
// kernel: tpu_custom_call.1
$region0: #{tpu_custom_call.1}
  #allocation0 [shape = 'u32[]', space=smem, size = 0x4, offset = 0x4, fixed_abs, tag = 'smem constant byte address 0x4 - core index']
  #allocation1 [shape = 'u32[144,128]{1,0:T(1,128)}', space=vmem, size = 0x12000, scoped, tag = 'internal scratch']
  %s0 = inlined_call_operand.hbm [shape: bf16[4,32,128], index: 0, kind: input, shape index: {}]
  %s1 = inlined_call_operand.hbm [shape: bf16[128,384], index: 1, kind: input, shape index: {}]
  %s2 = inlined_call_operand.hbm [shape: f32[4,32,128], index: 2, kind: output, shape index: {}]
  %s3 = sld [smem:[#allocation0]]
  $region49: #{tpu_custom_call.1} parent=0
    _
  %s5 = ssub.s32 1, %s3
  %s6 = scalar_select 0, %s5, %s3
  $region1: #{tpu_custom_call.1} parent=0
    #allocation2 [shape = 'u8[32768]{0}', space=vmem, size = 0x8000, scoped, tag = 'input window, operand 0']
    #allocation3 [shape = 's32[2]{0}', space=sflag, size = 0x8, scoped, tag = 'scoped memory for tpu_custom_call.1']
    #allocation4 [shape = 's32[2]{0}', space=sflag, size = 0x8, scoped, tag = 'scoped memory for tpu_custom_call.1']
    #allocation5 [shape = 'u8[98304]{0}', space=vmem, size = 0x18000, scoped, tag = 'input window, operand 1, single buffered']
    #allocation6 [shape = 's32[1]{0}', space=sflag, size = 0x4, scoped, tag = 'scoped memory for tpu_custom_call.1']
    #allocation7 [shape = 'u8[65536]{0}', space=vmem, size = 0x10000, scoped, tag = 'output window, operand 0']
    %7 = vsyncpa [#allocation3], 0
    %s8 = scalar_lea.sflag [#allocation3], 1
    %9 = vsyncpa %s8, 0
    %10 = vsyncpa [#allocation6], 0
    %11 = vsyncpa [#allocation4], 0
    %s12 = scalar_lea.sflag [#allocation4], 1
    %13 = vsyncpa %s12, 0
    loop: start=0, step=1, limit=4
    $region2: #{tpu_custom_call.1} parent=1 // loop_pre_header
      _
    $region3: #{tpu_custom_call.1} parent=1 // loop_header
      %s15 = sphi 0, %s19
      %p16 = scmp.ge.s32.totalorder %s15, 4
      %s25 = sphi 0, %s27
      %s28 = sphi 0, %s25
      %s29 = sphi 0, %s28
      %s45 = sphi 0, %s29
      %s49 = sphi 0, %s49
      %s51 = sphi 0, %s49
      %s52 = sphi 0, %s51
      %s66 = sphi 0, %s52
      %s72 = sphi 0, %s74
      %s75 = sphi 0, %s72
      %s76 = sphi 0, %s75
      %s92 = sphi 0, %s76
    $region4: #{tpu_custom_call.1} parent=1 // loop_header_branch
      %18 = sbr.rel (%p16) target = $region8
    $region5: #{tpu_custom_call.1} parent=1 // loop_body
      %s20 = ssub.s32 %s15, 1
      %s21 = ssub.s32 %s15, 2
      %s22 = sadd.s32 %s15, 1
      %s23 = ssub.s32 %s15, %s22
      %p24 = scmp.eq.s32.totalorder %s23, 0
      %s26 = sadd.s32 %s25, 1
      %s27 = scalar_select %p24, %s25, %s26
      %p30 = pneg %p24
      %p31 = scmp.eq.s32.totalorder %s15, 1
      %p32 = por %p30, %p31
      %p33 = scmp.ne.s32.totalorder %s25, %s28
      %p34 = scmp.eq.s32.totalorder %s15, 0
      %p35 = por %p33, %p34
      %p36 = scmp.ne.s32.totalorder %s25, %s28
      %p37 = scmp.eq.s32.totalorder %s20, 1
      %p38 = por %p36, %p37
      %p39 = scmp.ne.s32.totalorder %s28, %s29
      %p40 = scmp.eq.s32.totalorder %s20, 0
      %p41 = por %p39, %p40
      %p42 = scmp.ne.s32.totalorder %s28, %s29
      %p43 = scmp.eq.s32.totalorder %s21, 1
      %p44 = por %p42, %p43
      %p46 = scmp.ne.s32.totalorder %s29, %s45
      %p47 = scmp.eq.s32.totalorder %s21, 0
      %p48 = por %p46, %p47
      %s50 = sadd.s32 %s49, 1
      %p53 = scmp.eq.s32.totalorder %s15, 1
      %p54 = scmp.ne.s32.totalorder %s49, %s51
      %p55 = scmp.eq.s32.totalorder %s15, 0
      %p56 = por %p54, %p55
      %p57 = scmp.ne.s32.totalorder %s49, %s51
      %p58 = scmp.eq.s32.totalorder %s20, 1
      %p59 = por %p57, %p58
      %p60 = scmp.ne.s32.totalorder %s51, %s52
      %p61 = scmp.eq.s32.totalorder %s20, 0
      %p62 = por %p60, %p61
      %p63 = scmp.ne.s32.totalorder %s51, %s52
      %p64 = scmp.eq.s32.totalorder %s21, 1
      %p65 = por %p63, %p64
      %p67 = scmp.ne.s32.totalorder %s52, %s66
      %p68 = scmp.eq.s32.totalorder %s21, 0
      %p69 = por %p67, %p68
      %s70 = ssub.s32 %s15, %s22
      %p71 = scmp.eq.s32.totalorder %s70, 0
      %s73 = sadd.s32 %s72, 1
      %s74 = scalar_select %p71, %s72, %s73
      %p77 = pneg %p71
      %p78 = scmp.eq.s32.totalorder %s15, 1
      %p79 = por %p77, %p78
      %p80 = scmp.ne.s32.totalorder %s72, %s75
      %p81 = scmp.eq.s32.totalorder %s15, 0
      %p82 = por %p80, %p81
      %p83 = scmp.ne.s32.totalorder %s72, %s75
      %p84 = scmp.eq.s32.totalorder %s20, 1
      %p85 = por %p83, %p84
      %p86 = scmp.ne.s32.totalorder %s75, %s76
      %p87 = scmp.eq.s32.totalorder %s20, 0
      %p88 = por %p86, %p87
      %p89 = scmp.ne.s32.totalorder %s75, %s76
      %p90 = scmp.eq.s32.totalorder %s21, 1
      %p91 = por %p89, %p90
      %p93 = scmp.ne.s32.totalorder %s76, %s92
      %p94 = scmp.eq.s32.totalorder %s21, 0
      %p95 = por %p93, %p94
      %p96 = scmp.le.s32.totalorder 1, %s15
      %p97 = scmp.lt.s32.totalorder %s15, 3
      %p98 = pnand %p96, %p97
      %p99 = pneg %p98
      // Predicated region
      $region9: #{tpu_custom_call.1} parent=5 // pred_check
        _
      $region10: #{tpu_custom_call.1} parent=5 // pred_check_branch
        %101 = sbr.rel (%p98) target = $region12
      $region11: #{tpu_custom_call.1} parent=5 // pred_region
        %s102 = ssub.s32 %s15, 1
        // Predicated region
        $region13: #{tpu_custom_call.1} parent=11 // pred_check
          %p103 = pneg %p62
        $region14: #{tpu_custom_call.1} parent=11 // pred_check_branch
          %105 = sbr.rel (%p103) target = $region16
        $region15: #{tpu_custom_call.1} parent=11 // pred_region
          %s107 = ssub.s32 3072, 3072
          %108 = vsyncadd [#allocation6], %s107
          %s109 = sshll.u32 [#allocation5], 4
          %s110 = int_to_ptr.vmem [resolvable:$true] %s109
          %115 = dma.hbm_to_vmem [thread:$0]  %s1, 3072, %s110, [#allocation6], 192, 192, 12
        $region16: #{tpu_custom_call.1} parent=11 // pred_fallthru
          _
      $region12: #{tpu_custom_call.1} parent=5 // pred_fallthru
        _
      %p116 = scmp.lt.s32.totalorder %s15, 2
      // Predicated region
      $region17: #{tpu_custom_call.1} parent=5 // pred_check
        %p117 = pneg %p116
      $region18: #{tpu_custom_call.1} parent=5 // pred_check_branch
        %119 = sbr.rel (%p117) target = $region20
      $region19: #{tpu_custom_call.1} parent=5 // pred_region
        // Predicated region
        $region21: #{tpu_custom_call.1} parent=19 // pred_check
          %p120 = pneg %p35
        $region22: #{tpu_custom_call.1} parent=19 // pred_check_branch
          %122 = sbr.rel (%p120) target = $region24
        $region23: #{tpu_custom_call.1} parent=19 // pred_region
          %s123 = sand.u32 %s25, 1
          %s124 = scalar_lea.sflag [#allocation3], %s123
          %s125 = sand.u32 %s25, 1
          %s126 = smul.addr %s125, 32
          %s127 = scalar_lea.vmem [#allocation2], %s126
          %s128 = smul.u32 2, %s15
          %s130 = ssub.s32 512, 512
          %131 = vsyncadd %s124, %s130
          %s132 = smul.addr %s128, 4
          %s133 = smul.addr %s132, 64
          %s134 = scalar_lea.hbm %s0, %s133
          %s135 = sshll.u32 %s127, 4
          %s136 = int_to_ptr.vmem [resolvable:$true] %s135
          %141 = dma.hbm_to_vmem [thread:$0]  %s134, 512, %s136, %s124, 64, 64, 4
        $region24: #{tpu_custom_call.1} parent=19 // pred_fallthru
          _
      $region20: #{tpu_custom_call.1} parent=5 // pred_fallthru
        _
      %p142 = scmp.le.s32.totalorder 1, %s15
      %p143 = scmp.lt.s32.totalorder %s15, 3
      %p144 = pnand %p142, %p143
      %p145 = pneg %p144
      // Predicated region
      $region25: #{tpu_custom_call.1} parent=5 // pred_check
        _
      $region26: #{tpu_custom_call.1} parent=5 // pred_check_branch
        %147 = sbr.rel (%p144) target = $region28
      $region27: #{tpu_custom_call.1} parent=5 // pred_region
        %s148 = ssub.s32 %s15, 1
        %s149 = sand.u32 %s28, 1
        %s150 = scalar_lea.sflag [#allocation3], %s149
        %s151 = sand.u32 %s28, 1
        %s152 = smul.addr %s151, 32
        %s153 = scalar_lea.vmem [#allocation2], %s152
        // Predicated region
        $region29: #{tpu_custom_call.1} parent=27 // pred_check
          %p154 = pneg %p41
        $region30: #{tpu_custom_call.1} parent=27 // pred_check_branch
          %156 = sbr.rel (%p154) target = $region32
        $region31: #{tpu_custom_call.1} parent=27 // pred_region
          %157 = dma.done %s150, 512
        $region32: #{tpu_custom_call.1} parent=27 // pred_fallthru
          _
        // Predicated region
        $region33: #{tpu_custom_call.1} parent=27 // pred_check
          %p158 = pneg %p62
        $region34: #{tpu_custom_call.1} parent=27 // pred_check_branch
          %160 = sbr.rel (%p158) target = $region36
        $region35: #{tpu_custom_call.1} parent=27 // pred_region
          %161 = dma.done [#allocation6], 3072
        $region36: #{tpu_custom_call.1} parent=27 // pred_fallthru
          _
        %s162 = sand.u32 %s28, 1
        %s163 = scalar_lea.sflag [#allocation3], %s162
        %s164 = sand.u32 %s28, 1
        %s165 = smul.addr %s164, 32
        %s166 = scalar_lea.vmem [#allocation2], %s165
        %p167 = pneg %p41
        %p168 = pneg %p38
        %p169 = pneg %p62
        %p170 = pneg %p59
        %p171 = pneg %p88
        %p172 = pneg %p85
        %s173 = sand.u32 %s75, 1
        %s174 = scalar_lea.sflag [#allocation4], %s173
        %s175 = sand.u32 %s75, 1
        %s176 = smul.addr %s175, 64
        %s177 = scalar_lea.vmem [#allocation7], %s176
        %s178 = smul.u32 2, %s20
        %s179 = smul.u32 2, %s20
        %v181 = vld [vmem:[%s153] sm:$0xf]
        %v182 = vld [vmem:[%s153 + $0x4] sm:$0xf]
        %v183 = vld [vmem:[%s153 + $0x8] sm:$0xf]
        %v184 = vld [vmem:[%s153 + $0xc] sm:$0xf]
        %v185 = vld [vmem:[%s153 + $0x10] sm:$0xf]
        %v186 = vld [vmem:[%s153 + $0x14] sm:$0xf]
        %v187 = vld [vmem:[%s153 + $0x18] sm:$0xf]
        %v188 = vld [vmem:[%s153 + $0x1c] sm:$0xf]
        %v189 = vld [vmem:[#allocation5] sm:$0xff]
        %v190 = vld [vmem:[#allocation5 + $0x8] sm:$0xf]
        %v191 = vld [vmem:[#allocation5 + $0xc] sm:$0xff]
        %v192 = vld [vmem:[#allocation5 + $0x14] sm:$0xf]
        %v193 = vld [vmem:[#allocation5 + $0x18] sm:$0xff]
        %v194 = vld [vmem:[#allocation5 + $0x20] sm:$0xf]
        %v195 = vld [vmem:[#allocation5 + $0x24] sm:$0xff]
        %v196 = vld [vmem:[#allocation5 + $0x2c] sm:$0xf]
        %v197 = vld [vmem:[#allocation5 + $0x30] sm:$0xff]
        %v198 = vld [vmem:[#allocation5 + $0x38] sm:$0xf]
        %v199 = vld [vmem:[#allocation5 + $0x3c] sm:$0xff]
        %v200 = vld [vmem:[#allocation5 + $0x44] sm:$0xf]
        %v201 = vld [vmem:[#allocation5 + $0x48] sm:$0xff]
        %v202 = vld [vmem:[#allocation5 + $0x50] sm:$0xf]
        %v203 = vld [vmem:[#allocation5 + $0x54] sm:$0xff]
        %v204 = vld [vmem:[#allocation5 + $0x5c] sm:$0xf]
        %v205 = vld [vmem:[#allocation5 + $0x60] sm:$0xff]
        %v206 = vld [vmem:[#allocation5 + $0x68] sm:$0xf]
        %v207 = vld [vmem:[#allocation5 + $0x6c] sm:$0xff]
        %v208 = vld [vmem:[#allocation5 + $0x74] sm:$0xf]
        %v209 = vld [vmem:[#allocation5 + $0x78] sm:$0xff]
        %v210 = vld [vmem:[#allocation5 + $0x80] sm:$0xf]
        %v211 = vld [vmem:[#allocation5 + $0x84] sm:$0xff]
        %v212 = vld [vmem:[#allocation5 + $0x8c] sm:$0xf]
        %v213 = vld [vmem:[#allocation5 + $0x90] sm:$0xff]
        %v214 = vld [vmem:[#allocation5 + $0x98] sm:$0xf]
        %v215 = vld [vmem:[#allocation5 + $0x9c] sm:$0xff]
        %v216 = vld [vmem:[#allocation5 + $0xa4] sm:$0xf]
        %v217 = vld [vmem:[#allocation5 + $0xa8] sm:$0xff]
        %v218 = vld [vmem:[#allocation5 + $0xb0] sm:$0xf]
        %v219 = vld [vmem:[#allocation5 + $0xb4] sm:$0xff]
        %v220 = vld [vmem:[#allocation5 + $0xbc] sm:$0xf]
        %v229 = vunpack.c.l.b16 %v181
        %v230 = vunpack.c.l.b16 %v182
        %v231 = vunpack.c.l.b16 %v183
        %v232 = vunpack.c.l.b16 %v184
        %v233 = vunpack.c.l.b16 %v185
        %v234 = vunpack.c.l.b16 %v186
        %v235 = vunpack.c.l.b16 %v187
        %v236 = vunpack.c.l.b16 %v188
        %v237 = vpack.c.b16 %v230, %v229
        %v238 = vpack.c.b16 %v232, %v231
        %v239 = vpack.c.b16 %v234, %v233
        %v240 = vpack.c.b16 %v236, %v235
        %v277 = vunpack.c.l.b16 %v189
        %v278 = vunpack.c.h.b16 %v189
        %v279 = vunpack.c.l.b16 %v190
        %v280 = vunpack.c.l.b16 %v191
        %v281 = vunpack.c.h.b16 %v191
        %v282 = vunpack.c.l.b16 %v192
        %v283 = vunpack.c.l.b16 %v193
        %v284 = vunpack.c.h.b16 %v193
        %v285 = vunpack.c.l.b16 %v194
        %v286 = vunpack.c.l.b16 %v195
        %v287 = vunpack.c.h.b16 %v195
        %v288 = vunpack.c.l.b16 %v196
        %v289 = vunpack.c.l.b16 %v197
        %v290 = vunpack.c.h.b16 %v197
        %v291 = vunpack.c.l.b16 %v198
        %v292 = vunpack.c.l.b16 %v199
        %v293 = vunpack.c.h.b16 %v199
        %v294 = vunpack.c.l.b16 %v200
        %v295 = vunpack.c.l.b16 %v201
        %v296 = vunpack.c.h.b16 %v201
        %v297 = vunpack.c.l.b16 %v202
        %v298 = vunpack.c.l.b16 %v203
        %v299 = vunpack.c.h.b16 %v203
        %v300 = vunpack.c.l.b16 %v204
        %v301 = vunpack.c.l.b16 %v205
        %v302 = vunpack.c.h.b16 %v205
        %v303 = vunpack.c.l.b16 %v206
        %v304 = vunpack.c.l.b16 %v207
        %v305 = vunpack.c.h.b16 %v207
        %v306 = vunpack.c.l.b16 %v208
        %v307 = vunpack.c.l.b16 %v209
        %v308 = vunpack.c.h.b16 %v209
        %v309 = vunpack.c.l.b16 %v210
        %v310 = vunpack.c.l.b16 %v211
        %v311 = vunpack.c.h.b16 %v211
        %v312 = vunpack.c.l.b16 %v212
        %v313 = vunpack.c.l.b16 %v213
        %v314 = vunpack.c.h.b16 %v213
        %v315 = vunpack.c.l.b16 %v214
        %v316 = vunpack.c.l.b16 %v215
        %v317 = vunpack.c.h.b16 %v215
        %v318 = vunpack.c.l.b16 %v216
        %v319 = vunpack.c.l.b16 %v217
        %v320 = vunpack.c.h.b16 %v217
        %v321 = vunpack.c.l.b16 %v218
        %v322 = vunpack.c.l.b16 %v219
        %v323 = vunpack.c.h.b16 %v219
        %v324 = vunpack.c.l.b16 %v220
        %v325 = vpack.c.b16 %v280, %v277
        %v326 = vpack.c.b16 %v281, %v278
        %v327 = vpack.c.b16 %v282, %v279
        %v328 = vpack.c.b16 %v286, %v283
        %v329 = vpack.c.b16 %v287, %v284
        %v330 = vpack.c.b16 %v288, %v285
        %v331 = vpack.c.b16 %v292, %v289
        %v332 = vpack.c.b16 %v293, %v290
        %v333 = vpack.c.b16 %v294, %v291
        %v334 = vpack.c.b16 %v298, %v295
        %v335 = vpack.c.b16 %v299, %v296
        %v336 = vpack.c.b16 %v300, %v297
        %v337 = vpack.c.b16 %v304, %v301
        %v338 = vpack.c.b16 %v305, %v302
        %v339 = vpack.c.b16 %v306, %v303
        %v340 = vpack.c.b16 %v310, %v307
        %v341 = vpack.c.b16 %v311, %v308
        %v342 = vpack.c.b16 %v312, %v309
        %v343 = vpack.c.b16 %v316, %v313
        %v344 = vpack.c.b16 %v317, %v314
        %v345 = vpack.c.b16 %v318, %v315
        %v346 = vpack.c.b16 %v322, %v319
        %v347 = vpack.c.b16 %v323, %v320
        %v348 = vpack.c.b16 %v324, %v321
        %373 = vmatprep.subr.bf16.mxu0 %v347
        %374 = vmatpush1.bf16.msra.mxu0 %v346
        %375 = vmatprep.subr.bf16.mxu0 %v344
        %376 = vmatpush1.bf16.msra.mxu0 %v343
        %377 = vmatprep.subr.bf16.mxu0 %v341
        %378 = vmatpush1.bf16.msra.mxu0 %v340
        %379 = vmatprep.subr.bf16.mxu0 %v338
        %380 = vmatpush1.bf16.msra.mxu0 %v337
        %381 = vmatprep.subr.bf16.mxu0 %v335
        %382 = vmatpush1.bf16.msra.mxu0 %v334
        %383 = vmatprep.subr.bf16.mxu0 %v332
        %384 = vmatpush1.bf16.msra.mxu0 %v331
        %385 = vmatprep.subr.bf16.mxu0 %v329
        %386 = vmatpush1.bf16.msra.mxu0 %v328
        %387 = vmatprep.subr.bf16.mxu0 %v326
        %388 = vmatpush1.bf16.msra.mxu0 %v325
        %389 = vmatprep.subr.bf16.mxu0 0
        %390 = vmatpush2.bf16.msra.mxu0 0
        %391 = vmatprep.subr.bf16.mxu0 0
        %392 = vmatpush2.bf16.msra.mxu0 0
        %393 = vmatprep.subr.bf16.mxu0 0
        %394 = vmatpush2.bf16.msra.mxu0 0
        %395 = vmatprep.subr.bf16.mxu0 0
        %396 = vmatpush2.bf16.msra.mxu0 0
        %397 = vmatprep.subr.bf16.mxu0 0
        %398 = vmatpush2.bf16.msra.mxu0 0
        %399 = vmatprep.subr.bf16.mxu0 0
        %400 = vmatpush2.bf16.msra.mxu0 0
        %401 = vmatprep.subr.bf16.mxu0 0
        %402 = vmatpush2.bf16.msra.mxu0 0
        %403 = vmatprep.subr.bf16.mxu0 0
        %404 = vmatpush2.bf16.msra.mxu0 0
        %405 = vmatprep.mubr.bf16.mxu0 0
        %406 = vmatmul.mubr.bf16.gmra.mxu0 %v237
        %v407 = vpop.f32.mrf.mxu0
        %v408 = vadd.f32 0.0, %v407
        %v409 = vpop.f32.mrf.mxu0
        %v410 = vadd.f32 0.0, %v409
        %v411 = vpop.f32.mrf.mxu0
        %v412 = vadd.f32 0.0, %v411
        %v413 = vpop.f32.mrf.mxu0
        %v414 = vadd.f32 0.0, %v413
        %415 = vmatprep.mubr.bf16.mxu0 0
        %416 = vmatmul.mubr.bf16.gmra.mxu0 %v238
        %v417 = vpop.f32.mrf.mxu0
        %v418 = vadd.f32 0.0, %v417
        %v419 = vpop.f32.mrf.mxu0
        %v420 = vadd.f32 0.0, %v419
        %v421 = vpop.f32.mrf.mxu0
        %v422 = vadd.f32 0.0, %v421
        %v423 = vpop.f32.mrf.mxu0
        %v424 = vadd.f32 0.0, %v423
        %425 = vmatprep.mubr.bf16.mxu0 0
        %426 = vmatmul.mubr.bf16.gmra.mxu0 %v239
        %v427 = vpop.f32.mrf.mxu0
        %v428 = vadd.f32 0.0, %v427
        %v429 = vpop.f32.mrf.mxu0
        %v430 = vadd.f32 0.0, %v429
        %v431 = vpop.f32.mrf.mxu0
        %v432 = vadd.f32 0.0, %v431
        %v433 = vpop.f32.mrf.mxu0
        %v434 = vadd.f32 0.0, %v433
        %435 = vmatprep.mubr.bf16.mxu0 0
        %436 = vmatmul.mubr.bf16.gmra.mxu0 %v240
        %v437 = vpop.f32.mrf.mxu0
        %v438 = vadd.f32 0.0, %v437
        %v439 = vpop.f32.mrf.mxu0
        %v440 = vadd.f32 0.0, %v439
        %v441 = vpop.f32.mrf.mxu0
        %v442 = vadd.f32 0.0, %v441
        %v443 = vpop.f32.mrf.mxu0
        %v444 = vadd.f32 0.0, %v443
        %445 = vdwg.mxu0
        %446 = vmatprep.subr.bf16.mxu0 0
        %447 = vmatpush1.bf16.msra.mxu0 %v348
        %448 = vmatprep.subr.bf16.mxu0 0
        %449 = vmatpush1.bf16.msra.mxu0 %v345
        %450 = vmatprep.subr.bf16.mxu0 0
        %451 = vmatpush1.bf16.msra.mxu0 %v342
        %452 = vmatprep.subr.bf16.mxu0 0
        %453 = vmatpush1.bf16.msra.mxu0 %v339
        %454 = vmatprep.subr.bf16.mxu0 0
        %455 = vmatpush1.bf16.msra.mxu0 %v336
        %456 = vmatprep.subr.bf16.mxu0 0
        %457 = vmatpush1.bf16.msra.mxu0 %v333
        %458 = vmatprep.subr.bf16.mxu0 0
        %459 = vmatpush1.bf16.msra.mxu0 %v330
        %460 = vmatprep.subr.bf16.mxu0 0
        %461 = vmatpush1.bf16.msra.mxu0 %v327
        %462 = vmatprep.subr.bf16.mxu0 0
        %463 = vmatpush2.bf16.msra.mxu0 0
        %464 = vmatprep.subr.bf16.mxu0 0
        %465 = vmatpush2.bf16.msra.mxu0 0
        %466 = vmatprep.subr.bf16.mxu0 0
        %467 = vmatpush2.bf16.msra.mxu0 0
        %468 = vmatprep.subr.bf16.mxu0 0
        %469 = vmatpush2.bf16.msra.mxu0 0
        %470 = vmatprep.subr.bf16.mxu0 0
        %471 = vmatpush2.bf16.msra.mxu0 0
        %472 = vmatprep.subr.bf16.mxu0 0
        %473 = vmatpush2.bf16.msra.mxu0 0
        %474 = vmatprep.subr.bf16.mxu0 0
        %475 = vmatpush2.bf16.msra.mxu0 0
        %476 = vmatprep.subr.bf16.mxu0 0
        %477 = vmatpush2.bf16.msra.mxu0 0
        %478 = vmatprep.mubr.bf16.mxu0 0
        %479 = vmatmul.mubr.bf16.gmra.mxu0 %v237
        %v480 = vpop.f32.mrf.mxu0
        %v481 = vadd.f32 0.0, %v480
        %v482 = vpop.f32.mrf.mxu0
        %v483 = vpop.f32.mrf.mxu0
        %v484 = vadd.f32 0.0, %v483
        %v485 = vpop.f32.mrf.mxu0
        %486 = vmatprep.mubr.bf16.mxu0 0
        %487 = vmatmul.mubr.bf16.gmra.mxu0 %v238
        %v488 = vpop.f32.mrf.mxu0
        %v489 = vadd.f32 0.0, %v488
        %v490 = vpop.f32.mrf.mxu0
        %v491 = vpop.f32.mrf.mxu0
        %v492 = vadd.f32 0.0, %v491
        %v493 = vpop.f32.mrf.mxu0
        %494 = vmatprep.mubr.bf16.mxu0 0
        %495 = vmatmul.mubr.bf16.gmra.mxu0 %v239
        %v496 = vpop.f32.mrf.mxu0
        %v497 = vadd.f32 0.0, %v496
        %v498 = vpop.f32.mrf.mxu0
        %v499 = vpop.f32.mrf.mxu0
        %v500 = vadd.f32 0.0, %v499
        %v501 = vpop.f32.mrf.mxu0
        %502 = vmatprep.mubr.bf16.mxu0 0
        %503 = vmatmul.mubr.bf16.gmra.mxu0 %v240
        %v504 = vpop.f32.mrf.mxu0
        %v505 = vadd.f32 0.0, %v504
        %v506 = vpop.f32.mrf.mxu0
        %v507 = vpop.f32.mrf.mxu0
        %v508 = vadd.f32 0.0, %v507
        %v509 = vpop.f32.mrf.mxu0
        %510 = vdwg.mxu0
        %511 = vmatprep.subr.mxu0 0.0
        %512 = vmatpush1.xpose.msra.mxu0 0.0
        %513 = vmatprep.subr.mxu0 0.0
        %514 = vmatpush1.xpose.msra.mxu0 0.0
        %515 = vmatprep.subr.mxu0 0.0
        %516 = vmatpush1.xpose.msra.mxu0 0.0
        %517 = vmatprep.subr.mxu0 0.0
        %518 = vmatpush1.xpose.msra.mxu0 0.0
        %519 = vmatprep.subr.mxu0 0.0
        %520 = vmatpush1.xpose.msra.mxu0 0.0
        %521 = vmatprep.subr.mxu0 0.0
        %522 = vmatpush1.xpose.msra.mxu0 0.0
        %523 = vmatprep.subr.mxu0 0.0
        %524 = vmatpush1.xpose.msra.mxu0 0.0
        %525 = vmatprep.subr.mxu0 0.0
        %526 = vmatpush1.xpose.msra.mxu0 0.0
        %527 = vmatprep.subr.mxu0 0.0
        %528 = vmatpush1.xpose.msra.mxu0 0.0
        %529 = vmatprep.subr.mxu0 0.0
        %530 = vmatpush1.xpose.msra.mxu0 0.0
        %531 = vmatprep.subr.mxu0 0.0
        %532 = vmatpush1.xpose.msra.mxu0 0.0
        %533 = vmatprep.subr.mxu0 0.0
        %534 = vmatpush1.xpose.msra.mxu0 0.0
        %535 = vmatprep.subr.mxu0 0.0
        %536 = vmatpush1.xpose.msra.mxu0 %v424
        %537 = vmatprep.subr.mxu0 0.0
        %538 = vmatpush1.xpose.msra.mxu0 %v420
        %539 = vmatprep.subr.mxu0 0.0
        %540 = vmatpush1.xpose.msra.mxu0 %v414
        %541 = vmatprep.subr.mxu0 0.0
        %542 = vmatpush1.xpose.msra.mxu0 %v410
        %543 = vmatprep.subr.mxu0 0.0
        %544 = vmatpush2.xpose.msra.mxu0 0.0
        %545 = vmatprep.subr.mxu0 0.0
        %546 = vmatpush2.xpose.msra.mxu0 0.0
        %547 = vmatprep.subr.mxu0 0.0
        %548 = vmatpush2.xpose.msra.mxu0 0.0
        %549 = vmatprep.subr.mxu0 0.0
        %550 = vmatpush2.xpose.msra.mxu0 0.0
        %551 = vmatprep.subr.mxu0 0.0
        %552 = vmatpush2.xpose.msra.mxu0 0.0
        %553 = vmatprep.subr.mxu0 0.0
        %554 = vmatpush2.xpose.msra.mxu0 0.0
        %555 = vmatprep.subr.mxu0 0.0
        %556 = vmatpush2.xpose.msra.mxu0 0.0
        %557 = vmatprep.subr.mxu0 0.0
        %558 = vmatpush2.xpose.msra.mxu0 0.0
        %559 = vmatprep.subr.mxu0 0.0
        %560 = vmatpush2.xpose.msra.mxu0 0.0
        %561 = vmatprep.subr.mxu0 0.0
        %562 = vmatpush2.xpose.msra.mxu0 0.0
        %563 = vmatprep.subr.mxu0 0.0
        %564 = vmatpush2.xpose.msra.mxu0 0.0
        %565 = vmatprep.subr.mxu0 0.0
        %566 = vmatpush2.xpose.msra.mxu0 0.0
        %567 = vmatprep.subr.mxu0 0.0
        %568 = vmatpush2.xpose.msra.mxu0 0.0
        %569 = vmatprep.subr.mxu0 0.0
        %570 = vmatpush2.xpose.msra.mxu0 0.0
        %571 = vmatprep.subr.mxu0 0.0
        %572 = vmatpush2.xpose.msra.mxu0 0.0
        %573 = vmatprep.subr.mxu0 0.0
        %574 = vmatpush2.xpose.msra.mxu0 0.0
        %575 = vmatprep.mubr.f32.mxu0 0.0
        %576 = vmatmul.mubr.f32.gmra.mxu0 %v408
        %v577 = vpop.f32.mrf.mxu0
        %v578 = vadd.f32 0.0, %v577
        %v579 = vpop.f32.mrf.mxu0
        %580 = vmatprep.mubr.f32.mxu0 0.0
        %581 = vmatmul.mubr.f32.gmra.mxu0 %v412
        %v582 = vpop.f32.mrf.mxu0
        %v583 = vadd.f32 0.0, %v582
        %v584 = vpop.f32.mrf.mxu0
        %585 = vmatprep.mubr.f32.mxu0 0.0
        %586 = vmatmul.mubr.f32.gmra.mxu0 %v418
        %v587 = vpop.f32.mrf.mxu0
        %v588 = vadd.f32 0.0, %v587
        %v589 = vpop.f32.mrf.mxu0
        %590 = vmatprep.mubr.f32.mxu0 0.0
        %591 = vmatmul.mubr.f32.gmra.mxu0 %v422
        %v592 = vpop.f32.mrf.mxu0
        %v593 = vadd.f32 0.0, %v592
        %v594 = vpop.f32.mrf.mxu0
        %595 = vdwg.mxu0
        %596 = vmatprep.subr.mxu0 0.0
        %597 = vmatpush1.xpose.msra.mxu0 0.0
        %598 = vmatprep.subr.mxu0 0.0
        %599 = vmatpush1.xpose.msra.mxu0 0.0
        %600 = vmatprep.subr.mxu0 0.0
        %601 = vmatpush1.xpose.msra.mxu0 0.0
        %602 = vmatprep.subr.mxu0 0.0
        %603 = vmatpush1.xpose.msra.mxu0 0.0
        %604 = vmatprep.subr.mxu0 0.0
        %605 = vmatpush1.xpose.msra.mxu0 0.0
        %606 = vmatprep.subr.mxu0 0.0
        %607 = vmatpush1.xpose.msra.mxu0 0.0
        %608 = vmatprep.subr.mxu0 0.0
        %609 = vmatpush1.xpose.msra.mxu0 0.0
        %610 = vmatprep.subr.mxu0 0.0
        %611 = vmatpush1.xpose.msra.mxu0 0.0
        %612 = vmatprep.subr.mxu0 0.0
        %613 = vmatpush1.xpose.msra.mxu0 0.0
        %614 = vmatprep.subr.mxu0 0.0
        %615 = vmatpush1.xpose.msra.mxu0 0.0
        %616 = vmatprep.subr.mxu0 0.0
        %617 = vmatpush1.xpose.msra.mxu0 0.0
        %618 = vmatprep.subr.mxu0 0.0
        %619 = vmatpush1.xpose.msra.mxu0 0.0
        %620 = vmatprep.subr.mxu0 0.0
        %621 = vmatpush1.xpose.msra.mxu0 %v444
        %622 = vmatprep.subr.mxu0 0.0
        %623 = vmatpush1.xpose.msra.mxu0 %v440
        %624 = vmatprep.subr.mxu0 0.0
        %625 = vmatpush1.xpose.msra.mxu0 %v434
        %626 = vmatprep.subr.mxu0 0.0
        %627 = vmatpush1.xpose.msra.mxu0 %v430
        %628 = vmatprep.subr.mxu0 0.0
        %629 = vmatpush2.xpose.msra.mxu0 0.0
        %630 = vmatprep.subr.mxu0 0.0
        %631 = vmatpush2.xpose.msra.mxu0 0.0
        %632 = vmatprep.subr.mxu0 0.0
        %633 = vmatpush2.xpose.msra.mxu0 0.0
        %634 = vmatprep.subr.mxu0 0.0
        %635 = vmatpush2.xpose.msra.mxu0 0.0
        %636 = vmatprep.subr.mxu0 0.0
        %637 = vmatpush2.xpose.msra.mxu0 0.0
        %638 = vmatprep.subr.mxu0 0.0
        %639 = vmatpush2.xpose.msra.mxu0 0.0
        %640 = vmatprep.subr.mxu0 0.0
        %641 = vmatpush2.xpose.msra.mxu0 0.0
        %642 = vmatprep.subr.mxu0 0.0
        %643 = vmatpush2.xpose.msra.mxu0 0.0
        %644 = vmatprep.subr.mxu0 0.0
        %645 = vmatpush2.xpose.msra.mxu0 0.0
        %646 = vmatprep.subr.mxu0 0.0
        %647 = vmatpush2.xpose.msra.mxu0 0.0
        %648 = vmatprep.subr.mxu0 0.0
        %649 = vmatpush2.xpose.msra.mxu0 0.0
        %650 = vmatprep.subr.mxu0 0.0
        %651 = vmatpush2.xpose.msra.mxu0 0.0
        %652 = vmatprep.subr.mxu0 0.0
        %653 = vmatpush2.xpose.msra.mxu0 0.0
        %654 = vmatprep.subr.mxu0 0.0
        %655 = vmatpush2.xpose.msra.mxu0 0.0
        %656 = vmatprep.subr.mxu0 0.0
        %657 = vmatpush2.xpose.msra.mxu0 0.0
        %658 = vmatprep.subr.mxu0 0.0
        %659 = vmatpush2.xpose.msra.mxu0 0.0
        %660 = vmatprep.mubr.f32.mxu0 0.0
        %661 = vmatmul.mubr.f32.gmra.mxu0 %v428
        %v662 = vpop.f32.mrf.mxu0
        %v663 = vadd.f32 0.0, %v662
        %v664 = vpop.f32.mrf.mxu0
        %665 = vmatprep.mubr.f32.mxu0 0.0
        %666 = vmatmul.mubr.f32.gmra.mxu0 %v432
        %v667 = vpop.f32.mrf.mxu0
        %v668 = vadd.f32 0.0, %v667
        %v669 = vpop.f32.mrf.mxu0
        %670 = vmatprep.mubr.f32.mxu0 0.0
        %671 = vmatmul.mubr.f32.gmra.mxu0 %v438
        %v672 = vpop.f32.mrf.mxu0
        %v673 = vadd.f32 0.0, %v672
        %v674 = vpop.f32.mrf.mxu0
        %675 = vmatprep.mubr.f32.mxu0 0.0
        %676 = vmatmul.mubr.f32.gmra.mxu0 %v442
        %v677 = vpop.f32.mrf.mxu0
        %v678 = vadd.f32 0.0, %v677
        %v679 = vpop.f32.mrf.mxu0
        %680 = vdwg.mxu0
        %v681 = vlaneseq
        %v682 = vand.u32 %v681, 127
        %vm683 = vcmp.lt.s32.totalorder %v682, 32
        %v684 = vsel %vm683, %v578, -1e+30
        %v685 = vsel %vm683, %v583, -1e+30
        %v686 = vsel %vm683, %v588, -1e+30
        %v687 = vsel %vm683, %v593, -1e+30
        %v688 = vsel %vm683, %v663, -1e+30
        %v689 = vsel %vm683, %v668, -1e+30
        %v690 = vsel %vm683, %v673, -1e+30
        %v691 = vsel %vm683, %v678, -1e+30
        %692 = vmax.xlane.f32.xlu0 %v684
        %v693 = vpop.xlane.xlu0 %692
        %694 = vmax.xlane.f32.xlu0 %v685
        %v695 = vpop.xlane.xlu0 %694
        %696 = vmax.xlane.f32.xlu0 %v686
        %v697 = vpop.xlane.xlu0 %696
        %698 = vmax.xlane.f32.xlu0 %v687
        %v699 = vpop.xlane.xlu0 %698
        %700 = vmax.xlane.f32.xlu0 %v688
        %v701 = vpop.xlane.xlu0 %700
        %702 = vmax.xlane.f32.xlu0 %v689
        %v703 = vpop.xlane.xlu0 %702
        %704 = vmax.xlane.f32.xlu0 %v690
        %v705 = vpop.xlane.xlu0 %704
        %706 = vmax.xlane.f32.xlu0 %v691
        %v707 = vpop.xlane.xlu0 %706
        %v708 = vsub.f32 %v684, %v693
        %v709 = vsub.f32 %v685, %v695
        %v710 = vsub.f32 %v686, %v697
        %v711 = vsub.f32 %v687, %v699
        %v712 = vsub.f32 %v688, %v701
        %v713 = vsub.f32 %v689, %v703
        %v714 = vsub.f32 %v690, %v705
        %v715 = vsub.f32 %v691, %v707
        %v716 = vmul.f32 %v708, 1.442695
        %v717 = vpow.pop %v716
        %v718 = vmul.f32 %v709, 1.442695
        %v719 = vpow.pop %v718
        %v720 = vmul.f32 %v710, 1.442695
        %v721 = vpow.pop %v720
        %v722 = vmul.f32 %v711, 1.442695
        %v723 = vpow.pop %v722
        %v724 = vmul.f32 %v712, 1.442695
        %v725 = vpow.pop %v724
        %v726 = vmul.f32 %v713, 1.442695
        %v727 = vpow.pop %v726
        %v728 = vmul.f32 %v714, 1.442695
        %v729 = vpow.pop %v728
        %v730 = vmul.f32 %v715, 1.442695
        %v731 = vpow.pop %v730
        %732 = vadd.xlane.f32.xlu0 %v717
        %v733 = vpop.xlane.xlu0 %732
        %734 = vadd.xlane.f32.xlu0 %v719
        %v735 = vpop.xlane.xlu0 %734
        %736 = vadd.xlane.f32.xlu0 %v721
        %v737 = vpop.xlane.xlu0 %736
        %738 = vadd.xlane.f32.xlu0 %v723
        %v739 = vpop.xlane.xlu0 %738
        %740 = vadd.xlane.f32.xlu0 %v725
        %v741 = vpop.xlane.xlu0 %740
        %742 = vadd.xlane.f32.xlu0 %v727
        %v743 = vpop.xlane.xlu0 %742
        %744 = vadd.xlane.f32.xlu0 %v729
        %v745 = vpop.xlane.xlu0 %744
        %746 = vadd.xlane.f32.xlu0 %v731
        %v747 = vpop.xlane.xlu0 %746
        %v748 = vrcp.pop %v733
        %v749 = vmul.f32 %v717, %v748
        %v750 = vrcp.pop %v735
        %v751 = vmul.f32 %v719, %v750
        %v752 = vrcp.pop %v737
        %v753 = vmul.f32 %v721, %v752
        %v754 = vrcp.pop %v739
        %v755 = vmul.f32 %v723, %v754
        %v756 = vrcp.pop %v741
        %v757 = vmul.f32 %v725, %v756
        %v758 = vrcp.pop %v743
        %v759 = vmul.f32 %v727, %v758
        %v760 = vrcp.pop %v745
        %v761 = vmul.f32 %v729, %v760
        %v762 = vrcp.pop %v747
        %v763 = vmul.f32 %v731, %v762
        %v764 = vmul.f32 %v749, %v481
        %v765 = vmul.f32 %v751, %v484
        %v766 = vmul.f32 %v753, %v489
        %v767 = vmul.f32 %v755, %v492
        %v768 = vmul.f32 %v757, %v497
        %v769 = vmul.f32 %v759, %v500
        %v770 = vmul.f32 %v761, %v505
        %v771 = vmul.f32 %v763, %v508
        %772 = vst [vmem:[%s177] sm:$0xff] %v764
        %773 = vst [vmem:[%s177 + $0x8] sm:$0xff] %v765
        %774 = vst [vmem:[%s177 + $0x10] sm:$0xff] %v766
        %775 = vst [vmem:[%s177 + $0x18] sm:$0xff] %v767
        %776 = vst [vmem:[%s177 + $0x20] sm:$0xff] %v768
        %777 = vst [vmem:[%s177 + $0x28] sm:$0xff] %v769
        %778 = vst [vmem:[%s177 + $0x30] sm:$0xff] %v770
        %779 = vst [vmem:[%s177 + $0x38] sm:$0xff] %v771
        %s780 = sand.u32 %s75, 1
        %s781 = scalar_lea.sflag [#allocation4], %s780
        %s782 = sand.u32 %s75, 1
        %s783 = smul.addr %s782, 64
        %s784 = scalar_lea.vmem [#allocation7], %s783
        // Predicated region
        $region37: #{tpu_custom_call.1} parent=27 // pred_check
          %p785 = pneg %p85
        $region38: #{tpu_custom_call.1} parent=27 // pred_check_branch
          %787 = sbr.rel (%p785) target = $region40
        $region39: #{tpu_custom_call.1} parent=27 // pred_region
          %s788 = smul.u32 2, %s20
          %s790 = ssub.s32 1024, 1024
          %791 = vsyncadd %s781, %s790
          %s792 = smul.addr %s788, 4
          %s793 = smul.addr %s792, 128
          %s794 = scalar_lea.hbm %s2, %s793
          %s795 = sshll.u32 %s784, 4
          %s796 = int_to_ptr.vmem [resolvable:$true] %s795
          %801 = dma.vmem_to_hbm [thread:$0]  %s796, 1024, %s794, %s781, 128, 128, 8
        $region40: #{tpu_custom_call.1} parent=27 // pred_fallthru
          _
      $region28: #{tpu_custom_call.1} parent=5 // pred_fallthru
        _
      %p802 = scmp.le.s32.totalorder 2, %s15
      // Predicated region
      $region41: #{tpu_custom_call.1} parent=5 // pred_check
        %p803 = pneg %p802
      $region42: #{tpu_custom_call.1} parent=5 // pred_check_branch
        %805 = sbr.rel (%p803) target = $region44
      $region43: #{tpu_custom_call.1} parent=5 // pred_region
        %s806 = ssub.s32 %s15, 2
        // Predicated region
        $region45: #{tpu_custom_call.1} parent=43 // pred_check
          %p807 = pneg %p91
        $region46: #{tpu_custom_call.1} parent=43 // pred_check_branch
          %809 = sbr.rel (%p807) target = $region48
        $region47: #{tpu_custom_call.1} parent=43 // pred_region
          %s810 = sand.u32 %s76, 1
          %s811 = scalar_lea.sflag [#allocation4], %s810
          %s812 = sand.u32 %s76, 1
          %s813 = smul.addr %s812, 64
          %s814 = scalar_lea.vmem [#allocation7], %s813
          %815 = dma.done %s811, 1024
        $region48: #{tpu_custom_call.1} parent=43 // pred_fallthru
          _
      $region44: #{tpu_custom_call.1} parent=5 // pred_fallthru
        _
    $region6: #{tpu_custom_call.1} parent=1 // loop_footer
      %s19 = sadd.s32 1, %s15
    $region7: #{tpu_custom_call.1} parent=1 // loop_footer_branch
      %14 = sbr.rel target = $region3
    $region8: #{tpu_custom_call.1} parent=1 // loop_exit
      _
    %816 = vsyncpa [#allocation3], 1
    %s817 = scalar_lea.sflag [#allocation3], 1
    %818 = vsyncpa %s817, 1
    %819 = vsyncpa [#allocation6], 1
    %820 = vsyncpa [#allocation4], 1
    %s821 = scalar_lea.sflag [#allocation4], 1
    %822 = vsyncpa %s821, 1

</llo_original>
